<compile_context>
chip_gen: v5e
topology: v5e:2x2
jax: 0.10.0
libtpu: 0.0.40
codegen_flags: <defaults>
</compile_context>

<pallas_src>
import math

import jax
import jax.numpy as jnp
from jax.experimental import pallas as pl
from jax.experimental.pallas import tpu as pltpu


def _round_up(x, m):
    return ((x + m - 1) // m) * m


def _pick_tile(total, candidates):
    for c in candidates:
        if total % c == 0:
            return c
    return total


# -----------------------------------------------------------------------------
# Kernels
# -----------------------------------------------------------------------------
def _variational_kernel_resident(x_ref, w_ref, b_ref, o_ref):
    """Whole-K matmul for one (TM, TN) output tile; W tile resident in VMEM."""
    acc = jnp.dot(x_ref[...], w_ref[...], preferred_element_type=jnp.float32)
    o_ref[...] = acc + b_ref[...]


def _variational_kernel_tiled(x_ref, w_ref, b_ref, o_ref):
    """K/N/M-tiled matmul. Output block is f32 and resident across the k axis,
    so we accumulate directly into it (no scratch accumulator)."""
    k = pl.program_id(2)

    @pl.when(k == 0)
    def _init():
        o_ref[...] = jnp.zeros_like(o_ref)

    o_ref[...] += jnp.dot(x_ref[...], w_ref[...],
                          preferred_element_type=jnp.float32)

    @pl.when(k == pl.num_programs(2) - 1)
    def _finalize():
        o_ref[...] += b_ref[...]


# -----------------------------------------------------------------------------
# Params
# -----------------------------------------------------------------------------
def init_variational_params(key, embed_dim, dtype=jnp.float32):
    """Mimic nn.Linear init: uniform(-1/sqrt(E), 1/sqrt(E)).

    Weights are stored pre-transposed as (in, out), i.e. W_torch.T, so the
    forward is a plain x @ W.
    """
    k1, k2, k3, k4 = jax.random.split(key, 4)
    bound = 1.0 / math.sqrt(embed_dim)
    w_mean = jax.random.uniform(k1, (embed_dim, embed_dim), dtype, -bound, bound)
    b_mean = jax.random.uniform(k2, (embed_dim,), dtype, -bound, bound)
    w_logvar = jax.random.uniform(k3, (embed_dim, embed_dim), dtype, -bound, bound)
    b_logvar = jax.random.uniform(k4, (embed_dim,), dtype, -bound, bound)
    return w_mean, b_mean, w_logvar, b_logvar


def pack_variational_params(w_mean, b_mean, w_logvar, b_logvar,
                            weight_dtype=jnp.bfloat16):
    """Done ONCE at init: fuse both heads contiguously into one lane-dense
    weight, padding only the TOTAL width 2E up to a multiple of 128.

      w_cat : (E, N_p)  columns [0:E)=mean head, [E:2E)=logvar head, bf16
      b_cat : (1, N_p)  f32 (added to the f32 accumulator in-kernel)
    """
    E = w_mean.shape[0]
    N = 2 * E
    N_p = _round_up(N, 128)
    w_cat = jnp.concatenate([w_mean, w_logvar], axis=1).astype(weight_dtype)
    b_cat = jnp.concatenate([b_mean, b_logvar])[None, :].astype(jnp.float32)
    if N_p != N:
        w_cat = jnp.pad(w_cat, ((0, 0), (0, N_p - N)))
        b_cat = jnp.pad(b_cat, ((0, 0), (0, N_p - N)))
    return w_cat, b_cat, E, N_p


# -----------------------------------------------------------------------------
# Wrapper
# -----------------------------------------------------------------------------
_VMEM_LIMIT = 32 * 1024 * 1024   # safe scoped limit on v5e / v6e / v7x
_VMEM_BUDGET = 24 * 1024 * 1024  # headroom for metadata / semaphores
_MAX_TM = 256


def variational_layer(x, packed, *, force_tiled=False):
    """x: (B, E). Returns (mean, logvar), each (B, E) in x.dtype."""
    w_cat, b_cat, E, N_p = packed
    B = x.shape[0]
    out_dtype = x.dtype

    # bf16 activations to match the weights; MXU accumulates in f32.
    x_c = x.astype(w_cat.dtype)

    # ---- M tiling: minimize B_p - B and avoid a materialized padded copy ----
    if B <= _MAX_TM:
        TM, B_p = B, B                       # single full-dim M block, no copy
    else:
        B_p = _round_up(B, 8)                # sublane alignment only
        TM = next(t for t in (256, 128, 64, 32, 16, 8) if B_p % t == 0)
        if B_p != B:
            x_c = jnp.pad(x_c, ((0, B_p - B), (0, 0)))
    m_blocks = B_p // TM

    x_item = jnp.dtype(x_c.dtype).itemsize
    w_item = jnp.dtype(w_cat.dtype).itemsize
    w_bytes = E * N_p * w_item

    # Double-buffered working set if W stays fully resident (TN=N_p, TK=E).
    resident_vmem = 2 * (TM * E * x_item + w_bytes + TM * N_p * 4) + N_p * 4
    use_resident = (not force_tiled) and resident_vmem <= _VMEM_BUDGET

    if use_resident:
        # If there is only one M block, split N so v7x's 2nd TensorCore gets a
        # parallel block (no-op on v5e/v6e). Otherwise keep one N block so the
        # weight DMA happens exactly once (block index constant over i).
        n_blocks = 2 if (m_blocks == 1 and N_p % 256 == 0) else 1
        TN = N_p // n_blocks
        grid = (m_blocks, n_blocks)
        kernel = _variational_kernel_resident
        in_specs = [
            pl.BlockSpec((TM, E), lambda i, j: (i, 0)),    # x tile (full K)
            pl.BlockSpec((E, TN), lambda i, j: (0, j)),    # fused W (resident)
            pl.BlockSpec((1, TN), lambda i, j: (0, j)),    # fused bias row
        ]
        out_specs = pl.BlockSpec((TM, TN), lambda i, j: (i, j))
        dims = ("parallel", "parallel")
        x_reads, w_reads = n_blocks, 1
    else:
        # K/N/M tiled fallback for large E.
        # TODO(synk): if E is huge AND not a multiple of 128, TK=E may exceed
        # VMEM; that unusual case would need explicit K zero-padding.
        TK = _pick_tile(E, (512, 256, 128)) if E % 128 == 0 else E
        TN = _pick_tile(N_p, (512, 256, 128))
        grid = (m_blocks, N_p // TN, E // TK)
        kernel = _variational_kernel_tiled
        in_specs = [
            pl.BlockSpec((TM, TK), lambda i, j, k: (i, k)),
            pl.BlockSpec((TK, TN), lambda i, j, k: (k, j)),
            pl.BlockSpec((1, TN), lambda i, j, k: (0, j)),
        ]
        out_specs = pl.BlockSpec((TM, TN), lambda i, j, k: (i, j))
        dims = ("parallel", "parallel", "arbitrary")
        x_reads, w_reads = N_p // TN, m_blocks

    cost = pl.CostEstimate(
        flops=2 * B_p * E * N_p,
        bytes_accessed=(x_reads * B_p * E * x_item
                        + w_reads * E * N_p * w_item
                        + B_p * N_p * 4
                        + N_p * 4),
        transcendentals=0,
    )

    out = pl.pallas_call(
        kernel,
        out_shape=jax.ShapeDtypeStruct((B_p, N_p), jnp.float32),
        grid_spec=pltpu.PrefetchScalarGridSpec(
            num_scalar_prefetch=0,
            grid=grid,
            in_specs=in_specs,
            out_specs=out_specs,
        ),
        compiler_params=pltpu.CompilerParams(
            dimension_semantics=dims,
            vmem_limit_bytes=_VMEM_LIMIT,
        ),
        cost_estimate=cost,
    )(x_c, w_cat, b_cat)

    # Contiguous packing -> heads live at [0:E) and [E:2E).
    mean = out[:B, :E].astype(out_dtype)
    logvar = out[:B, E:2 * E].astype(out_dtype)
    return mean, logvar


def _reference(x, w_mean, b_mean, w_logvar, b_logvar):
    """Pure-JAX reference at kernel precision (bf16 inputs, f32 accumulate)."""
    xc = x.astype(jnp.bfloat16).astype(jnp.float32)
    wm = w_mean.astype(jnp.bfloat16).astype(jnp.float32)
    wl = w_logvar.astype(jnp.bfloat16).astype(jnp.float32)
    mean = jnp.dot(xc, wm, preferred_element_type=jnp.float32) + b_mean
    logvar = jnp.dot(xc, wl, preferred_element_type=jnp.float32) + b_logvar
    return mean, logvar


if __name__ == "__main__":
    key = jax.random.PRNGKey(0)
    kx, kp = jax.random.split(key)

    # --- primary test: small demo shapes, exercises the W-resident path ------
    batch, embed_dim = 8, 32
    x = jax.random.normal(kx, (batch, embed_dim), dtype=jnp.float32)
    params = init_variational_params(kp, embed_dim)
    packed = pack_variational_params(*params)   # fuse + bf16 + pad, once

    mean, logvar = variational_layer(x, packed)
    jax.block_until_ready((mean, logvar))

    mean_ref, logvar_ref = _reference(x, *params)
    assert mean.shape == (batch, embed_dim)
    assert logvar.shape == (batch, embed_dim)
    assert jnp.allclose(mean, mean_ref, atol=5e-3, rtol=5e-3)
    assert jnp.allclose(logvar, logvar_ref, atol=5e-3, rtol=5e-3)

    # --- secondary test: force the K/N-tiled fallback path -------------------
    batch2, embed_dim2 = 16, 384
    kx2, kp2 = jax.random.split(jax.random.PRNGKey(1))
    x2 = jax.random.normal(kx2, (batch2, embed_dim2), dtype=jnp.float32)
    params2 = init_variational_params(kp2, embed_dim2)
    packed2 = pack_variational_params(*params2)

    mean2, logvar2 = variational_layer(x2, packed2, force_tiled=True)
    jax.block_until_ready((mean2, logvar2))

    mean2_ref, logvar2_ref = _reference(x2, *params2)
    assert jnp.allclose(mean2, mean2_ref, atol=5e-3, rtol=5e-3)
    assert jnp.allclose(logvar2, logvar2_ref, atol=5e-3, rtol=5e-3)

    print("KERNEL_OK")
</pallas_src>

<mosaic_0001>
module attributes {stable_mosaic.version = 11 : i64} {
  func.func @_variational_kernel_resident(%arg0: i32, %arg1: i32, %arg2: memref<8x32xbf16, #tpu.memory_space<vmem>>, %arg3: memref<32x128xbf16, #tpu.memory_space<vmem>>, %arg4: memref<1x128xf32, #tpu.memory_space<vmem>>, %arg5: memref<8x128xf32, #tpu.memory_space<vmem>>) attributes {dimension_semantics = [#tpu.dimension_semantics<parallel>, #tpu.dimension_semantics<parallel>], iteration_bounds = array<i64: 1, 1>, scalar_prefetch = 0 : i64, scratch_operands = 0 : i64, tpu.core_type = #tpu.core_type<tc>, window_params = [{transform_indices = @transform_0, window_bounds = array<i64: 8, 32>}, {transform_indices = @transform_1, window_bounds = array<i64: 32, 128>}, {transform_indices = @transform_2, window_bounds = array<i64: 1, 128>}, {transform_indices = @transform_3, window_bounds = array<i64: 8, 128>}]} {
    %c0 = arith.constant 0 : index
    %c0_0 = arith.constant 0 : index
    %0 = vector.load %arg2[%c0, %c0_0] : memref<8x32xbf16, #tpu.memory_space<vmem>>, vector<8x32xbf16>
    %c0_1 = arith.constant 0 : index
    %c0_2 = arith.constant 0 : index
    %1 = vector.load %arg3[%c0_1, %c0_2] : memref<32x128xbf16, #tpu.memory_space<vmem>>, vector<32x128xbf16>
    %cst = arith.constant dense<0.000000e+00> : vector<8x128xf32>
    %2 = tpu.matmul %0, %1, %cst {dimension_numbers = #tpu.dot_dimension_numbers<[1], [0], [0], [1], [0, 0, 1, 1], [], []>} : vector<8x32xbf16>, vector<32x128xbf16>, vector<8x128xf32> -> vector<8x128xf32>
    %c0_3 = arith.constant 0 : index
    %c0_4 = arith.constant 0 : index
    %3 = vector.load %arg4[%c0_3, %c0_4] : memref<1x128xf32, #tpu.memory_space<vmem>>, vector<1x128xf32>
    %4 = vector.broadcast %3 : vector<1x128xf32> to vector<8x128xf32>
    %5 = arith.addf %2, %4 : vector<8x128xf32>
    %c0_5 = arith.constant 0 : index
    %c0_6 = arith.constant 0 : index
    %6 = vector.load %arg5[%c0_5, %c0_6] : memref<8x128xf32, #tpu.memory_space<vmem>>, vector<8x128xf32>
    tpu.vector_store %arg5[%c0_5, %c0_6], %5 {strides = array<i32>} : memref<8x128xf32, #tpu.memory_space<vmem>>, vector<8x128xf32>,
    return
  }
  func.func @transform_0(%arg0: i32, %arg1: i32) -> (i32, i32) {
    %c0_i32 = arith.constant 0 : i32
    %c0_i32_0 = arith.constant 0 : i32
    return %arg0, %c0_i32 : i32, i32
  }
  func.func @transform_1(%arg0: i32, %arg1: i32) -> (i32, i32) {
    %c0_i32 = arith.constant 0 : i32
    %c0_i32_0 = arith.constant 0 : i32
    return %c0_i32, %arg1 : i32, i32
  }
  func.func @transform_2(%arg0: i32, %arg1: i32) -> (i32, i32) {
    %c0_i32 = arith.constant 0 : i32
    %c0_i32_0 = arith.constant 0 : i32
    return %c0_i32, %arg1 : i32, i32
  }
  func.func @transform_3(%arg0: i32, %arg1: i32) -> (i32, i32) {
    %c0_i32 = arith.constant 0 : i32
    return %arg0, %arg1 : i32, i32
  }
}

</mosaic_0001>

<llo_original>
// kernel: tpu_custom_call.1
$region0: #{tpu_custom_call.1}
  #allocation0 [shape = 'u32[]', space=smem, size = 0x4, offset = 0x4, fixed_abs, tag = 'smem constant byte address 0x4 - core index']
  #allocation1 [shape = 'u32[72,128]{1,0:T(1,128)}', space=vmem, size = 0x9000, scoped, tag = 'internal scratch']
  %s0 = inlined_call_operand.hbm [shape: bf16[8,32], index: 0, kind: input, shape index: {}]
  %s1 = inlined_call_operand.hbm [shape: bf16[32,128], index: 1, kind: input, shape index: {}]
  %s2 = inlined_call_operand.vmem [shape: f32[1,128], index: 2, kind: input, shape index: {}]
  %s3 = inlined_call_operand.hbm [shape: f32[8,128], index: 3, kind: output, shape index: {}]
  %s4 = sld [smem:[#allocation0]]
  $region30: #{tpu_custom_call.1} parent=0
    _
  %s6 = ssub.s32 1, %s4
  %s7 = scalar_select 0, %s6, %s4
  $region1: #{tpu_custom_call.1} parent=0
    #allocation2 [shape = 'u8[2048]{0}', space=vmem, size = 0x800, scoped, tag = 'input window, operand 0, single buffered']
    #allocation3 [shape = 's32[1]{0}', space=sflag, size = 0x4, scoped, tag = 'scoped memory for tpu_custom_call.1']
    #allocation4 [shape = 's32[1]{0}', space=sflag, size = 0x4, scoped, tag = 'scoped memory for tpu_custom_call.1']
    #allocation5 [shape = 'u8[8192]{0}', space=vmem, size = 0x2000, scoped, tag = 'input window, operand 1, single buffered']
    #allocation6 [shape = 's32[1]{0}', space=sflag, size = 0x4, scoped, tag = 'scoped memory for tpu_custom_call.1']
    #allocation7 [shape = 'u8[4096]{0}', space=vmem, size = 0x1000, scoped, tag = 'output window, operand 0, single buffered']
    %8 = vsyncpa [#allocation3], 0
    %9 = vsyncpa [#allocation6], 0
    %10 = vsyncpa [#allocation4], 0
    // Predicated region
    $region2: #{tpu_custom_call.1} parent=1 // pred_check
      _
    $region3: #{tpu_custom_call.1} parent=1 // pred_check_branch
      %12 = sbr.rel (0) target = $region5
    $region4: #{tpu_custom_call.1} parent=1 // pred_region
      %14 = vsyncadd [#allocation3], 0
      %s16 = sshll.u32 %s0, 4
      %s17 = int_to_ptr.hbm [resolvable:$true] %s16
      %s18 = sshll.u32 [#allocation2], 4
      %s19 = int_to_ptr.vmem [resolvable:$true] %s18
      %21 = dma.hbm_to_vmem [thread:$0]  %s17, 64, %s19, [#allocation3]
    $region5: #{tpu_custom_call.1} parent=1 // pred_fallthru
      _
    // Predicated region
    $region6: #{tpu_custom_call.1} parent=1 // pred_check
      _
    $region7: #{tpu_custom_call.1} parent=1 // pred_check_branch
      %23 = sbr.rel (0) target = $region9
    $region8: #{tpu_custom_call.1} parent=1 // pred_region
      %25 = vsyncadd [#allocation6], 0
      %s26 = sshll.u32 %s1, 4
      %s27 = int_to_ptr.hbm [resolvable:$true] %s26
      %s28 = sshll.u32 [#allocation5], 4
      %s29 = int_to_ptr.vmem [resolvable:$true] %s28
      %34 = dma.hbm_to_vmem [thread:$0]  %s27, 256, %s29, [#allocation6], 64, 64, 4
    $region9: #{tpu_custom_call.1} parent=1 // pred_fallthru
      _
    // Predicated region
    $region10: #{tpu_custom_call.1} parent=1 // pred_check
      _
    $region11: #{tpu_custom_call.1} parent=1 // pred_check_branch
      %36 = sbr.rel (0) target = $region13
    $region12: #{tpu_custom_call.1} parent=1 // pred_region
      _
    $region13: #{tpu_custom_call.1} parent=1 // pred_fallthru
      _
    // Predicated region
    $region14: #{tpu_custom_call.1} parent=1 // pred_check
      _
    $region15: #{tpu_custom_call.1} parent=1 // pred_check_branch
      %38 = sbr.rel (0) target = $region17
    $region16: #{tpu_custom_call.1} parent=1 // pred_region
      %40 = dma.done [#allocation3], 64
    $region17: #{tpu_custom_call.1} parent=1 // pred_fallthru
      _
    // Predicated region
    $region18: #{tpu_custom_call.1} parent=1 // pred_check
      _
    $region19: #{tpu_custom_call.1} parent=1 // pred_check_branch
      %42 = sbr.rel (0) target = $region21
    $region20: #{tpu_custom_call.1} parent=1 // pred_region
      %44 = dma.done [#allocation6], 256
    $region21: #{tpu_custom_call.1} parent=1 // pred_fallthru
      _
    %v46 = vld [vmem:[#allocation2] sm:$0xf]
    %v47 = vld [vmem:[#allocation5] sm:$0xf]
    %v48 = vld [vmem:[#allocation5 + $0x4] sm:$0xf]
    %v49 = vld [vmem:[#allocation5 + $0x8] sm:$0xf]
    %v50 = vld [vmem:[#allocation5 + $0xc] sm:$0xf]
    %v51 = vld [vmem:[%s2] sm:$0x1]
    %v53 = vperm.slane %v51, 0
    %v59 = vunpack.c.l.b16 %v47
    %v60 = vunpack.c.l.b16 %v48
    %v61 = vunpack.c.l.b16 %v49
    %v62 = vunpack.c.l.b16 %v50
    %v63 = vpack.c.b16 %v60, %v59
    %v64 = vpack.c.b16 %v62, %v61
    %vm67 = vcmask 261120
    %v69 = vsel %vm67, %v46, 0
    %71 = vmatpush.bf16.msra.mxu0 0
    %72 = vmatpush.bf16.msra.mxu0 0
    %73 = vmatpush.bf16.msra.mxu0 0
    %74 = vmatpush.bf16.msra.mxu0 0
    %75 = vmatpush.bf16.msra.mxu0 0
    %76 = vmatpush.bf16.msra.mxu0 0
    %77 = vmatpush.bf16.msra.mxu0 %v64
    %78 = vmatpush.bf16.msra.mxu0 %v63
    %79 = vmatmul.bf16.gmra.mxu0 %v69
    %v80 = vpop.f32.mrf.mxu0
    %v81 = vadd.f32 %v53, %v80
    %v82 = vpop.f32.mrf.mxu0
    %83 = vdwg.mxu0
    %84 = vst [vmem:[#allocation7] sm:$0xff] %v81
    // Predicated region
    $region22: #{tpu_custom_call.1} parent=1 // pred_check
      _
    $region23: #{tpu_custom_call.1} parent=1 // pred_check_branch
      %86 = sbr.rel (0) target = $region25
    $region24: #{tpu_custom_call.1} parent=1 // pred_region
      %88 = vsyncadd [#allocation4], 0
      %s90 = sshll.u32 [#allocation7], 4
      %s91 = int_to_ptr.vmem [resolvable:$true] %s90
      %s92 = sshll.u32 %s3, 4
      %s93 = int_to_ptr.hbm [resolvable:$true] %s92
      %95 = dma.vmem_to_hbm [thread:$0]  %s91, 128, %s93, [#allocation4]
    $region25: #{tpu_custom_call.1} parent=1 // pred_fallthru
      _
    // Predicated region
    $region26: #{tpu_custom_call.1} parent=1 // pred_check
      _
    $region27: #{tpu_custom_call.1} parent=1 // pred_check_branch
      %97 = sbr.rel (0) target = $region29
    $region28: #{tpu_custom_call.1} parent=1 // pred_region
      %99 = dma.done [#allocation4], 128
    $region29: #{tpu_custom_call.1} parent=1 // pred_fallthru
      _
    %100 = vsyncpa [#allocation3], 1
    %101 = vsyncpa [#allocation6], 1
    %102 = vsyncpa [#allocation4], 1

</llo_original>
